<compile_context>
chip_gen: v7x
topology: tpu7x:2x2x1
jax: 0.10.0
libtpu: 0.0.40
codegen_flags: <defaults>
</compile_context>

<pallas_src>
import jax
import jax.numpy as jnp
import numpy as np
from jax import lax
from jax.experimental import pallas as pl
from jax.experimental.pallas import tpu as pltpu


def _sel_dot(a, b):
    # Tiny 0/1 selection matmul on the (idle) MXU.  HIGHEST precision so f32 data
    # is not truncated to bf16 on the multiply path (exact for a 0/1 RHS).
    return jnp.dot(a, b, preferred_element_type=jnp.float32,
                   precision=lax.Precision.HIGHEST)


def _selection_matrices(k, W, Wo, dtype):
    """S_p[i, j] = 1 iff i == k*j + p  (picks within-window lane offset p)."""
    row = lax.broadcasted_iota(jnp.int32, (W, Wo), 0)
    col = lax.broadcasted_iota(jnp.int32, (W, Wo), 1)
    return [(row == k * col + p).astype(dtype) for p in range(k)]


def _make_pool_kernel(pooling, k, W, Wo, out_is_f32):
    """Kernel body for a given (static) pooling mode.

    Refs:
      coef_ref : SMEM (2,) f32 scalar coefficients (scalar-prefetched).
      x_ref    : VMEM (TR, k*W) block: each row holds the k input sub-rows of one
                 pooled output row, laid back to back along lanes.
      o_ref    : VMEM (TR, Wo) pooled output block.
    """
    inv_kk = 1.0 / (k * k)

    def kernel(coef_ref, x_ref, o_ref):
        x = x_ref[...]                                        # (TR, k*W) native dtype
        slabs = [x[:, i * W:(i + 1) * W] for i in range(k)]   # k x (TR, W)

        if pooling == "softmax_custom":
            # Softmax-weighted pooling over the k*k window (matches the module's
            # 2x2 unfold semantics for k == 2, the configured/tested case).
            t = coef_ref[0]
            sels = _selection_matrices(k, W, Wo, jnp.float32)
            vals = []                                          # k*k gathered slabs
            for r in slabs:
                rf = r.astype(jnp.float32)
                for sp in sels:
                    vals.append(_sel_dot(rf, sp))              # (TR, Wo) compacted
            scaled = [v * t for v in vals]
            m = scaled[0]
            for sv in scaled[1:]:
                m = jnp.maximum(m, sv)
            den = jnp.zeros_like(m)
            num = jnp.zeros_like(m)
            for v, sv in zip(vals, scaled):
                e = jnp.exp(sv - m)
                den = den + e
                num = num + e * v
            # EUP approx reciprocal (~bf16 accurate) only when the output dtype
            # cannot see the difference; exact divide for f32 outputs.
            out = num * pl.reciprocal(den, approx=not out_is_f32)
        else:
            need_avg = pooling != "original"
            # Fold over the k sub-rows: only small (TR, W) accumulators stay live
            # (no full-block f32 materialization).  Max folds in the native dtype.
            m = slabs[0]
            s = slabs[0].astype(jnp.float32) if need_avg else None
            for r in slabs[1:]:
                m = jnp.maximum(m, r)
                if need_avg:
                    s = s + r.astype(jnp.float32)

            sel_dtype = jnp.float32 if need_avg else m.dtype
            sels = _selection_matrices(k, W, Wo, sel_dtype)
            if need_avg:
                m = m.astype(jnp.float32)
            mx = _sel_dot(m, sels[0])                          # (TR, Wo) max-pool
            for sp in sels[1:]:
                mx = jnp.maximum(mx, _sel_dot(m, sp))

            if pooling == "original":
                out = mx
            else:
                psum = sels[0]
                for sp in sels[1:]:
                    psum = psum + sp
                av = _sel_dot(s, psum) * inv_kk                # (TR, Wo) avg-pool
                if pooling in ("avg_max", "weighted_avg_max", "sigmoid_avg_max"):
                    # coef_ref = [w_avg, w_max] precomputed in the wrapper.
                    out = coef_ref[0] * av + coef_ref[1] * mx
                elif pooling == "geometric_mean":
                    c = coef_ref[1]
                    # av**(1-c) * mx**c == exp((1-c) log av + c log mx):
                    # 3 transcendentals; positive activations assumed (torch.pow).
                    out = jnp.exp((1.0 - c) * jnp.log(av) + c * jnp.log(mx))
                elif pooling == "harmonic_mean":
                    c = coef_ref[1]
                    a = av + 1e-6
                    b = mx + 1e-6
                    # 1/((1-c)/a + c/b + 1e-6) rearranged to a single divide.
                    out = (a * b) / ((1.0 - c) * b + c * a + 1e-6 * a * b)
                else:
                    raise ValueError(f"pooling mode {pooling!r} not supported")

        o_ref[...] = out.astype(o_ref.dtype)

    return kernel


def _vmem_budget():
    """Generation-gated (scoped VMEM limit, per-block input byte target)."""
    try:
        vmem_phys = getattr(pltpu.get_tpu_info(), "vmem_capacity_bytes", None)
    except Exception:
        vmem_phys = None
    if vmem_phys is not None and vmem_phys > (64 << 20):
        return 64 << 20, 8 << 20      # v5e / v6e: 128 MiB physical VMEM
    return 32 << 20, 6 << 20          # v7x-class (64 MiB physical) or unknown


def _choose_row_tile(n_rows, row_bytes, target_bytes, row_align):
    """Rows per input block.

    Targets ~target_bytes per input block (amortizes the ~0.35 us grid-step
    overhead), keeps the sublane (row) dim aligned (16 for sub-32-bit dtypes,
    8 for f32), and arranges an even step count (>= 4 when possible) so both
    v7x TensorCores get balanced work.
    """
    n_tiles = -(-n_rows // row_align)
    cap = max(1, int(target_bytes) // max(1, int(row_align * row_bytes)))
    steps = max(1, -(-n_tiles // cap))
    if n_tiles >= 4:
        steps = max(steps, 4)
    elif n_tiles >= 2:
        steps = max(steps, 2)
    if (steps % 2) and (steps < n_tiles):
        steps += 1
    tr = -(-n_tiles // steps) * row_align
    realized = -(-n_rows // tr)
    if (realized % 2) and realized > 1 and tr > row_align:
        tr2 = tr - row_align
        if (-(-n_rows // tr2)) % 2 == 0:
            tr = tr2
    if tr >= n_rows:
        tr = n_rows
    return int(tr)


def custom_pool(x, pooling, params, kernel_size=2, stride=2):
    """Forward pass of CustomPoolLayer (adaptive=False, concat=False)."""
    assert kernel_size == stride, "only non-overlapping pooling windows supported"
    k = int(kernel_size)
    B, C, H, W = x.shape
    assert H % k == 0 and W % k == 0
    Ho, Wo = H // k, W // k
    R, KW = B * C * Ho, k * W

    # Free contiguous view; the k x k gather itself happens inside the kernel.
    xv = x.reshape(R, KW)

    maxc = params["maxpool_coef"]
    avgc = params["avgpool_coef"]
    poolc = params["pool_coef"]
    temp = params["temperature"]

    # Scalar coefficient glue (matches the PyTorch branch arithmetic).
    if pooling == "original":
        coef = jnp.zeros((2,), jnp.float32)
    elif pooling == "avg_max":
        coef = jnp.stack([avgc, maxc]).astype(jnp.float32)
    elif pooling == "weighted_avg_max":
        a2, m2 = avgc ** 2, maxc ** 2
        coef = jnp.stack([a2 / (a2 + m2), m2 / (a2 + m2)]).astype(jnp.float32)
    elif pooling in ("sigmoid_avg_max", "geometric_mean", "harmonic_mean"):
        c = jax.nn.sigmoid(poolc)
        coef = jnp.stack([1.0 - c, c]).astype(jnp.float32)
    elif pooling == "softmax_custom":
        coef = jnp.stack([temp, jnp.zeros_like(temp)]).astype(jnp.float32)
    else:
        # TODO(synk): 'fix_adaptive', adaptive=True and concat=True paths not implemented.
        raise ValueError("Not implemented yet!")

    itemsize = jnp.dtype(x.dtype).itemsize
    vmem_limit, target_bytes = _vmem_budget()
    row_align = 16 if itemsize < 4 else 8            # bf16 packs 2 rows / sublane
    tr = _choose_row_tile(R, KW * itemsize, target_bytes, row_align)
    grid = (pl.cdiv(R, tr),)

    # Advisory cost estimate so XLA can overlap this mem-bound call with neighbors.
    n_out = R * Wo
    sel_dots = k * k if pooling == "softmax_custom" else (k if pooling == "original" else k + 1)
    transcendentals = (k * k * n_out if pooling == "softmax_custom"
                       else 3 * n_out if pooling == "geometric_mean" else 0)
    cost = pl.CostEstimate(
        flops=int(2 * sel_dots * R * W * Wo + (4 * k * k + 8) * n_out),
        transcendentals=int(transcendentals),
        bytes_accessed=int((x.size + n_out) * itemsize),
    )

    kernel = _make_pool_kernel(pooling, k, W, Wo, out_is_f32=(x.dtype == jnp.float32))
    # TODO(synk): when Wo < 128, group Ho output rows into a (tbc, Ho*Wo) lane-dense
    # output slab to avoid masked vst.msk partial stores (few-% store-side effect).
    out = pl.pallas_call(
        kernel,
        out_shape=jax.ShapeDtypeStruct((R, Wo), x.dtype),
        grid_spec=pltpu.PrefetchScalarGridSpec(
            num_scalar_prefetch=1,                    # coef lands in SMEM
            grid=grid,
            in_specs=[pl.BlockSpec((tr, KW), lambda i, c: (i, 0))],
            out_specs=pl.BlockSpec((tr, Wo), lambda i, c: (i, 0)),
        ),
        compiler_params=pltpu.CompilerParams(
            dimension_semantics=("parallel",),
            vmem_limit_bytes=vmem_limit,
        ),
        cost_estimate=cost,
    )(coef, xv)
    return out.reshape(B, C, Ho, Wo)


def _pool_ref(x, pooling, params, k=2):
    """Plain-JAX reference mirroring the PyTorch forward."""
    B, C, H, W = x.shape
    xw = x.reshape(B, C, H // k, k, W // k, k)
    av = xw.mean(axis=(3, 5))
    mx = xw.max(axis=(3, 5))
    maxc = params["maxpool_coef"]
    avgc = params["avgpool_coef"]
    c = jax.nn.sigmoid(params["pool_coef"])
    t = params["temperature"]
    if pooling == "original":
        return mx
    if pooling == "avg_max":
        return avgc * av + maxc * mx
    if pooling == "weighted_avg_max":
        pa = avgc ** 2 / (avgc ** 2 + maxc ** 2)
        pm = maxc ** 2 / (avgc ** 2 + maxc ** 2)
        return pa * av + pm * mx
    if pooling == "sigmoid_avg_max":
        return (1.0 - c) * av + c * mx
    if pooling == "geometric_mean":
        return av ** (1.0 - c) * mx ** c
    if pooling == "harmonic_mean":
        return 1.0 / ((1.0 - c) / (av + 1e-6) + c / (mx + 1e-6) + 1e-6)
    if pooling == "softmax_custom":
        win = xw.transpose(0, 1, 2, 4, 3, 5).reshape(B, C, H // k, W // k, k * k)
        w = jax.nn.softmax(win * t, axis=-1)
        return jnp.sum(w * win, axis=-1)
    raise ValueError(pooling)


if __name__ == "__main__":
    key = jax.random.PRNGKey(0)
    x = jax.random.normal(key, (2, 4, 16, 16), dtype=jnp.float32)

    # Deterministic parameter init (mirrors __init__ arguments / defaults).
    params = {
        "maxpool_coef": jnp.float32(0.6),
        "avgpool_coef": jnp.float32(0.4),
        "pool_coef": jnp.float32(0.6),    # initialized from maxpool_coef in __init__
        "temperature": jnp.float32(0.5),  # t=0.5
    }

    modes = (
        "original",
        "avg_max",
        "weighted_avg_max",
        "sigmoid_avg_max",
        "softmax_custom",
        "geometric_mean",
        "harmonic_mean",
    )
    for mode in modes:
        # geometric/harmonic means are only well-defined for positive activations
        # (same precondition as the PyTorch pow/divide formulas).
        xin = x if mode not in ("geometric_mean", "harmonic_mean") else jnp.abs(x) + 0.1
        got = custom_pool(xin, mode, params, kernel_size=2, stride=2)
        jax.block_until_ready(got)
        assert got.shape == (2, 4, 8, 8)
        want = _pool_ref(xin, mode, params, k=2)
        np.testing.assert_allclose(
            np.asarray(got), np.asarray(want), rtol=5e-4, atol=1e-5,
            err_msg=f"mode={mode}",
        )

    print("KERNEL_OK")
</pallas_src>

<mosaic_0001>
module attributes {stable_mosaic.version = 11 : i64} {
  func.func @kernel(%arg0: i32, %arg1: memref<2xf32, #tpu.memory_space<smem>>, %arg2: memref<16x32xf32, #tpu.memory_space<vmem>>, %arg3: memref<16x8xf32, #tpu.memory_space<vmem>>) attributes {dimension_semantics = [#tpu.dimension_semantics<parallel>], iteration_bounds = array<i64: 4>, scalar_prefetch = 1 : i64, scratch_operands = 0 : i64, tpu.core_type = #tpu.core_type<tc>, window_params = [{transform_indices = @transform_0, window_bounds = array<i64: 16, 32>}, {transform_indices = @transform_1, window_bounds = array<i64: 16, 8>}]} {
    %c0 = arith.constant 0 : index
    %c0_0 = arith.constant 0 : index
    %0 = vector.load %arg2[%c0, %c0_0] : memref<16x32xf32, #tpu.memory_space<vmem>>, vector<16x32xf32>
    %1 = vector.extract_strided_slice %0 {offsets = [0, 0], sizes = [16, 16], strides = [1, 1]} : vector<16x32xf32> to vector<16x16xf32>
    %2 = vector.extract_strided_slice %0 {offsets = [0, 16], sizes = [16, 16], strides = [1, 1]} : vector<16x32xf32> to vector<16x16xf32>
    %3 = arith.maximumf %1, %2 : vector<16x16xf32>
    %4 = tpu.iota {dimensions = array<i32: 0>} : vector<16x8xi32>
    %5 = tpu.iota {dimensions = array<i32: 1>} : vector<16x8xi32>
    %c2_i32 = arith.constant 2 : i32
    %6 = vector.broadcast %c2_i32 : i32 to vector<16x8xi32>
    %7 = arith.muli %6, %5 : vector<16x8xi32>
    %c0_i32 = arith.constant 0 : i32
    %8 = vector.broadcast %c0_i32 : i32 to vector<16x8xi32>
    %9 = arith.addi %7, %8 : vector<16x8xi32>
    %10 = arith.cmpi eq, %4, %9 : vector<16x8xi32>
    %11 = arith.extui %10 : vector<16x8xi1> to vector<16x8xi32>
    %12 = arith.sitofp %11 : vector<16x8xi32> to vector<16x8xf32>
    %c2_i32_1 = arith.constant 2 : i32
    %13 = vector.broadcast %c2_i32_1 : i32 to vector<16x8xi32>
    %14 = arith.muli %13, %5 : vector<16x8xi32>
    %c1_i32 = arith.constant 1 : i32
    %15 = vector.broadcast %c1_i32 : i32 to vector<16x8xi32>
    %16 = arith.addi %14, %15 : vector<16x8xi32>
    %17 = arith.cmpi eq, %4, %16 : vector<16x8xi32>
    %18 = arith.extui %17 : vector<16x8xi1> to vector<16x8xi32>
    %19 = arith.sitofp %18 : vector<16x8xi32> to vector<16x8xf32>
    %cst = arith.constant dense<0.000000e+00> : vector<16x8xf32>
    %20 = tpu.matmul %3, %12, %cst {dimension_numbers = #tpu.dot_dimension_numbers<[1], [0], [0], [1], [0, 0, 1, 1], [], []>, precision = #tpu.contract_precision<fp32>} : vector<16x16xf32>, vector<16x8xf32>, vector<16x8xf32> -> vector<16x8xf32>
    %cst_2 = arith.constant dense<0.000000e+00> : vector<16x8xf32>
    %21 = tpu.matmul %3, %19, %cst_2 {dimension_numbers = #tpu.dot_dimension_numbers<[1], [0], [0], [1], [0, 0, 1, 1], [], []>, precision = #tpu.contract_precision<fp32>} : vector<16x16xf32>, vector<16x8xf32>, vector<16x8xf32> -> vector<16x8xf32>
    %22 = arith.maximumf %20, %21 : vector<16x8xf32>
    %c0_3 = arith.constant 0 : index
    %c0_4 = arith.constant 0 : index
    %23 = vector.load %arg3[%c0_3, %c0_4] : memref<16x8xf32, #tpu.memory_space<vmem>>, vector<16x8xf32>
    tpu.vector_store %arg3[%c0_3, %c0_4], %22 {strides = array<i32>} : memref<16x8xf32, #tpu.memory_space<vmem>>, vector<16x8xf32>,
    return
  }
  func.func @transform_0(%arg0: i32, %arg1: memref<2xf32, #tpu.memory_space<smem>>) -> (i32, i32) {
    %c0_i32 = arith.constant 0 : i32
    %c0_i32_0 = arith.constant 0 : i32
    return %arg0, %c0_i32 : i32, i32
  }
  func.func @transform_1(%arg0: i32, %arg1: memref<2xf32, #tpu.memory_space<smem>>) -> (i32, i32) {
    %c0_i32 = arith.constant 0 : i32
    %c0_i32_0 = arith.constant 0 : i32
    return %arg0, %c0_i32 : i32, i32
  }
}

</mosaic_0001>

<llo_original>
// kernel: tpu_custom_call.1
$region0: #{tpu_custom_call.1}
  #allocation0 [shape = 'u32[]', space=smem, size = 0x4, offset = 0x4, fixed_abs, tag = 'smem constant byte address 0x4 - core index']
  #allocation1 [shape = 'u32[144,128]{1,0:T(1,128)}', space=vmem, size = 0x12000, scoped, tag = 'internal scratch']
  #allocation2 [shape = 's32[1]{0}', space=sflag, size = 0x4, scoped, tag = 'scoped memory for tpu_custom_call.1']
  #allocation3 [shape = 'u8[512]{0}', space=smem, size = 0x200, scoped, tag = 'prefetched SMEM operand 0']
  %s0 = inlined_call_operand.vmem [shape: f32[2], index: 0, kind: input, shape index: {}]
  %s1 = inlined_call_operand.vmem [shape: f32[64,32], index: 1, kind: input, shape index: {}]
  %s2 = inlined_call_operand.vmem [shape: f32[64,8], index: 2, kind: output, shape index: {}]
  %s3 = sld [smem:[#allocation0]]
  $region37: #{tpu_custom_call.1} parent=0
    _
  %s5 = ssub.s32 1, %s3
  %s6 = scalar_select 0, %s5, %s3
  %s7 = sshll.u32 %s0, 4
  %s8 = int_to_ptr.vmem [resolvable:$true] %s7
  %10 = dma.vmem_to_smem %s8, 16, [#allocation3], [#allocation2]
  %11 = dma.done [#allocation2], 16
  %12 = sfence
  loop: start=0, step=1, limit=6
  $region2: #{tpu_custom_call.1} parent=0 // loop_pre_header
    _
  $region3: #{tpu_custom_call.1} parent=0 // loop_header
    %s14 = sphi 0, %s18
    %p15 = scmp.ge.s32.totalorder %s14, 6
    %s24 = sphi 0, %s26
    %s27 = sphi 0, %s24
    %s28 = sphi 0, %s27
    %s44 = sphi 0, %s28
    %s50 = sphi 0, %s52
    %s53 = sphi 0, %s50
    %s54 = sphi 0, %s53
    %s70 = sphi 0, %s54
  $region4: #{tpu_custom_call.1} parent=0 // loop_header_branch
    %17 = sbr.rel (%p15) target = $region8
  $region5: #{tpu_custom_call.1} parent=0 // loop_body
    %s19 = ssub.s32 %s14, 1
    %s20 = ssub.s32 %s14, 2
    %s21 = sadd.s32 %s14, 1
    %s22 = ssub.s32 %s14, %s21
    %p23 = scmp.eq.s32.totalorder %s22, 0
    %s25 = sadd.s32 %s24, 1
    %s26 = scalar_select %p23, %s24, %s25
    %p29 = pneg %p23
    %p30 = scmp.eq.s32.totalorder %s14, 3
    %p31 = por %p29, %p30
    %p32 = scmp.ne.s32.totalorder %s24, %s27
    %p33 = scmp.eq.s32.totalorder %s14, 0
    %p34 = por %p32, %p33
    %p35 = scmp.ne.s32.totalorder %s24, %s27
    %p36 = scmp.eq.s32.totalorder %s19, 3
    %p37 = por %p35, %p36
    %p38 = scmp.ne.s32.totalorder %s27, %s28
    %p39 = scmp.eq.s32.totalorder %s19, 0
    %p40 = por %p38, %p39
    %p41 = scmp.ne.s32.totalorder %s27, %s28
    %p42 = scmp.eq.s32.totalorder %s20, 3
    %p43 = por %p41, %p42
    %p45 = scmp.ne.s32.totalorder %s28, %s44
    %p46 = scmp.eq.s32.totalorder %s20, 0
    %p47 = por %p45, %p46
    %s48 = ssub.s32 %s14, %s21
    %p49 = scmp.eq.s32.totalorder %s48, 0
    %s51 = sadd.s32 %s50, 1
    %s52 = scalar_select %p49, %s50, %s51
    %p55 = pneg %p49
    %p56 = scmp.eq.s32.totalorder %s14, 3
    %p57 = por %p55, %p56
    %p58 = scmp.ne.s32.totalorder %s50, %s53
    %p59 = scmp.eq.s32.totalorder %s14, 0
    %p60 = por %p58, %p59
    %p61 = scmp.ne.s32.totalorder %s50, %s53
    %p62 = scmp.eq.s32.totalorder %s19, 3
    %p63 = por %p61, %p62
    %p64 = scmp.ne.s32.totalorder %s53, %s54
    %p65 = scmp.eq.s32.totalorder %s19, 0
    %p66 = por %p64, %p65
    %p67 = scmp.ne.s32.totalorder %s53, %s54
    %p68 = scmp.eq.s32.totalorder %s20, 3
    %p69 = por %p67, %p68
    %p71 = scmp.ne.s32.totalorder %s54, %s70
    %p72 = scmp.eq.s32.totalorder %s20, 0
    %p73 = por %p71, %p72
    %p74 = scmp.le.s32.totalorder 1, %s14
    %p75 = scmp.lt.s32.totalorder %s14, 5
    %p76 = pnand %p74, %p75
    %p77 = pneg %p76
    // Predicated region
    $region9: #{tpu_custom_call.1} parent=5 // pred_check
      _
    $region10: #{tpu_custom_call.1} parent=5 // pred_check_branch
      %79 = sbr.rel (%p76) target = $region12
    $region11: #{tpu_custom_call.1} parent=5 // pred_region
      %s80 = ssub.s32 %s14, 1
    $region12: #{tpu_custom_call.1} parent=5 // pred_fallthru
      _
    %p81 = scmp.lt.s32.totalorder %s14, 4
    // Predicated region
    $region13: #{tpu_custom_call.1} parent=5 // pred_check
      %p82 = pneg %p81
    $region14: #{tpu_custom_call.1} parent=5 // pred_check_branch
      %84 = sbr.rel (%p82) target = $region16
    $region15: #{tpu_custom_call.1} parent=5 // pred_region
      // Predicated region
      $region17: #{tpu_custom_call.1} parent=15 // pred_check
        %p85 = pneg %p34
      $region18: #{tpu_custom_call.1} parent=15 // pred_check_branch
        %87 = sbr.rel (%p85) target = $region20
      $region19: #{tpu_custom_call.1} parent=15 // pred_region
        %s88 = smul.u32 2, %s14
        %p89 = scmp.lt.s32.totalorder %s88, 7
        %s90 = scalar_select %p89, %s88, 7
        %s91 = smul.addr %s90, 8
        %s92 = scalar_lea.vmem %s1, %s91
        %s93 = smul.u32 2, %s14
      $region20: #{tpu_custom_call.1} parent=15 // pred_fallthru
        _
    $region16: #{tpu_custom_call.1} parent=5 // pred_fallthru
      _
    %p94 = scmp.le.s32.totalorder 1, %s14
    %p95 = scmp.lt.s32.totalorder %s14, 5
    %p96 = pnand %p94, %p95
    %p97 = pneg %p96
    // Predicated region
    $region21: #{tpu_custom_call.1} parent=5 // pred_check
      _
    $region22: #{tpu_custom_call.1} parent=5 // pred_check_branch
      %99 = sbr.rel (%p96) target = $region24
    $region23: #{tpu_custom_call.1} parent=5 // pred_region
      %s100 = ssub.s32 %s14, 1
      %s101 = smul.u32 2, %s19
      %p102 = scmp.lt.s32.totalorder %s101, 7
      %s103 = scalar_select %p102, %s101, 7
      %s104 = smul.addr %s103, 8
      %s105 = scalar_lea.vmem %s1, %s104
      %p106 = pneg %p40
      %p107 = pneg %p37
      %p108 = pneg %p66
      %p109 = pneg %p63
      %s110 = smul.u32 2, %s19
      %p111 = scmp.lt.s32.totalorder %s110, 7
      %s112 = scalar_select %p111, %s110, 7
      %s113 = smul.addr %s112, 8
      %s114 = scalar_lea.vmem %s2, %s113
      %s115 = smul.u32 2, %s19
      %p116 = scmp.lt.s32.totalorder %s115, 7
      %s117 = scalar_select %p116, %s115, 7
      %s118 = smul.addr %s117, 8
      %s119 = scalar_lea.vmem %s1, %s118
      %s120 = smul.u32 2, %s19
      %s121 = smul.u32 2, %s19
      %p122 = scmp.lt.s32.totalorder %s121, 7
      %s123 = scalar_select %p122, %s121, 7
      %s124 = smul.addr %s123, 8
      %s125 = scalar_lea.vmem %s2, %s124
      %s126 = smul.u32 2, %s19
      %v127 = vld [vmem:[%s119] sm:$0xff]
      %v128 = vld [vmem:[%s119 + $0x8] sm:$0xff]
      %131 = vrot.lane.b32.xlu0 %v127, 112
      %v132 = vpop.permute.xlu0 %131
      %133 = vrot.lane.b32.xlu0 %v128, 112
      %v134 = vpop.permute.xlu0 %133
      %v137 = vmax.f32 %v127, %v132
      %v138 = vmax.f32 %v128, %v134
      %v139 = vlaneseq
      %v140 = vshrl.u32 %v139, 7
      %v141 = vadd.s32 %v140, 8
      %v142 = vlaneseq
      %v143 = vand.u32 %v142, 127
      %v144 = vmul.u32 %v143, 2
      %vm145 = vcmp.eq.s32.totalorder %v140, %v144
      %vm146 = vcmp.eq.s32.totalorder %v141, %v144
      %v147 = vsel %vm145, 1, 0
      %v148 = vsel %vm146, 1, 0
      %v149 = vcvt.s32.f32 %v147
      %v150 = vcvt.s32.f32 %v148
      %v151 = vadd.s32 %v144, 1
      %vm152 = vcmp.eq.s32.totalorder %v140, %v151
      %vm153 = vcmp.eq.s32.totalorder %v141, %v151
      %v154 = vsel %vm152, 1, 0
      %v155 = vsel %vm153, 1, 0
      %v156 = vcvt.s32.f32 %v154
      %v157 = vcvt.s32.f32 %v155
      %vm158 = vcmask 130048
      %v160 = vsel %vm158, %v137, 0
      %v163 = vsel %vm158, %v138, 0
      %165 = vmatprep.subr.mxu0 0.0
      %v166 = vand.u32 %v149, 4294901760
      %167 = vmatpush1.msra.mxu0 %v166
      %168 = vmatprep.subr.mxu0 0.0
      %v169 = vand.u32 %v150, 4294901760
      %170 = vmatpush1.msra.mxu0 %v169
      %171 = vmatprep.subr.mxu0 0.0
      %172 = vmatpush1.msra.mxu0 0.0
      %173 = vmatprep.subr.mxu0 0.0
      %174 = vmatpush1.msra.mxu0 0.0
      %175 = vmatprep.subr.mxu0 0.0
      %176 = vmatpush1.msra.mxu0 0.0
      %177 = vmatprep.subr.mxu0 0.0
      %178 = vmatpush1.msra.mxu0 0.0
      %179 = vmatprep.subr.mxu0 0.0
      %180 = vmatpush1.msra.mxu0 0.0
      %181 = vmatprep.subr.mxu0 0.0
      %182 = vmatpush1.msra.mxu0 0.0
      %183 = vmatprep.subr.mxu0 0.0
      %184 = vmatpush1.msra.mxu0 0.0
      %185 = vmatprep.subr.mxu0 0.0
      %186 = vmatpush1.msra.mxu0 0.0
      %187 = vmatprep.subr.mxu0 0.0
      %188 = vmatpush1.msra.mxu0 0.0
      %189 = vmatprep.subr.mxu0 0.0
      %190 = vmatpush1.msra.mxu0 0.0
      %191 = vmatprep.subr.mxu0 0.0
      %192 = vmatpush1.msra.mxu0 0.0
      %193 = vmatprep.subr.mxu0 0.0
      %194 = vmatpush1.msra.mxu0 0.0
      %195 = vmatprep.subr.mxu0 0.0
      %196 = vmatpush1.msra.mxu0 0.0
      %197 = vmatprep.subr.mxu0 0.0
      %198 = vmatpush1.msra.mxu0 0.0
      %199 = vmatprep.subr.mxu0 0.0
      %200 = vmatpush1.msra.mxu0 0.0
      %201 = vmatprep.subr.mxu0 0.0
      %202 = vmatpush1.msra.mxu0 0.0
      %203 = vmatprep.subr.mxu0 0.0
      %204 = vmatpush1.msra.mxu0 0.0
      %205 = vmatprep.subr.mxu0 0.0
      %206 = vmatpush1.msra.mxu0 0.0
      %207 = vmatprep.subr.mxu0 0.0
      %208 = vmatpush1.msra.mxu0 0.0
      %209 = vmatprep.subr.mxu0 0.0
      %210 = vmatpush1.msra.mxu0 0.0
      %211 = vmatprep.subr.mxu0 0.0
      %212 = vmatpush1.msra.mxu0 0.0
      %213 = vmatprep.subr.mxu0 0.0
      %214 = vmatpush1.msra.mxu0 0.0
      %215 = vmatprep.subr.mxu0 0.0
      %216 = vmatpush1.msra.mxu0 0.0
      %217 = vmatprep.subr.mxu0 0.0
      %218 = vmatpush1.msra.mxu0 0.0
      %219 = vmatprep.subr.mxu0 0.0
      %220 = vmatpush1.msra.mxu0 0.0
      %221 = vmatprep.subr.mxu0 0.0
      %222 = vmatpush1.msra.mxu0 0.0
      %223 = vmatprep.subr.mxu0 0.0
      %224 = vmatpush1.msra.mxu0 0.0
      %225 = vmatprep.subr.mxu0 0.0
      %226 = vmatpush1.msra.mxu0 0.0
      %227 = vmatprep.subr.mxu0 0.0
      %228 = vmatpush1.msra.mxu0 0.0
      %229 = vmatprep.subr.mxu0 0.0
      %230 = vmatpush1.msra.mxu0 0.0
      %231 = vmatprep.mubr.f32.mxu0 0.0
      %v232 = vand.u32 %v160, 4294901760
      %v233 = vsub.f32 %v160, %v232
      %v234 = vand.u32 %v233, 4294901760
      %v235 = vsub.f32 %v233, %v234
      %v236 = vand.u32 %v235, 4294901760
      %237 = vmatmul.mubr.f32.gmra.mrb[0].mxu0 %v236
      %v238 = vpop.f32.mrb[0].mxu0
      %v239 = vadd.f32 0.0, %v238
      %v240 = vpop.f32.mrb[0].mxu0
      %241 = vmatprep.mubr.f32.mxu0 0.0
      %v242 = vand.u32 %v163, 4294901760
      %v243 = vsub.f32 %v163, %v242
      %v244 = vand.u32 %v243, 4294901760
      %v245 = vsub.f32 %v243, %v244
      %v246 = vand.u32 %v245, 4294901760
      %247 = vmatmul.mubr.f32.gmra.mrb[0].mxu0 %v246
      %v248 = vpop.f32.mrb[0].mxu0
      %v249 = vadd.f32 0.0, %v248
      %v250 = vpop.f32.mrb[0].mxu0
      %251 = vdwg.mxu0
      %252 = vmatprep.subr.mxu0 0.0
      %v253 = vand.u32 %v149, 4294901760
      %v254 = vsub.f32 %v149, %v253
      %v255 = vand.u32 %v254, 4294901760
      %v256 = vsub.f32 %v254, %v255
      %v257 = vand.u32 %v256, 4294901760
      %258 = vmatpush1.msra.mxu0 %v257
      %259 = vmatprep.subr.mxu0 0.0
      %v260 = vand.u32 %v150, 4294901760
      %v261 = vsub.f32 %v150, %v260
      %v262 = vand.u32 %v261, 4294901760
      %v263 = vsub.f32 %v261, %v262
      %v264 = vand.u32 %v263, 4294901760
      %265 = vmatpush1.msra.mxu0 %v264
      %266 = vmatprep.subr.mxu0 0.0
      %267 = vmatpush1.msra.mxu0 0.0
      %268 = vmatprep.subr.mxu0 0.0
      %269 = vmatpush1.msra.mxu0 0.0
      %270 = vmatprep.subr.mxu0 0.0
      %271 = vmatpush1.msra.mxu0 0.0
      %272 = vmatprep.subr.mxu0 0.0
      %273 = vmatpush1.msra.mxu0 0.0
      %274 = vmatprep.subr.mxu0 0.0
      %275 = vmatpush1.msra.mxu0 0.0
      %276 = vmatprep.subr.mxu0 0.0
      %277 = vmatpush1.msra.mxu0 0.0
      %278 = vmatprep.subr.mxu0 0.0
      %279 = vmatpush1.msra.mxu0 0.0
      %280 = vmatprep.subr.mxu0 0.0
      %281 = vmatpush1.msra.mxu0 0.0
      %282 = vmatprep.subr.mxu0 0.0
      %283 = vmatpush1.msra.mxu0 0.0
      %284 = vmatprep.subr.mxu0 0.0
      %285 = vmatpush1.msra.mxu0 0.0
      %286 = vmatprep.subr.mxu0 0.0
      %287 = vmatpush1.msra.mxu0 0.0
      %288 = vmatprep.subr.mxu0 0.0
      %289 = vmatpush1.msra.mxu0 0.0
      %290 = vmatprep.subr.mxu0 0.0
      %291 = vmatpush1.msra.mxu0 0.0
      %292 = vmatprep.subr.mxu0 0.0
      %293 = vmatpush1.msra.mxu0 0.0
      %294 = vmatprep.subr.mxu0 0.0
      %295 = vmatpush1.msra.mxu0 0.0
      %296 = vmatprep.subr.mxu0 0.0
      %297 = vmatpush1.msra.mxu0 0.0
      %298 = vmatprep.subr.mxu0 0.0
      %299 = vmatpush1.msra.mxu0 0.0
      %300 = vmatprep.subr.mxu0 0.0
      %301 = vmatpush1.msra.mxu0 0.0
      %302 = vmatprep.subr.mxu0 0.0
      %303 = vmatpush1.msra.mxu0 0.0
      %304 = vmatprep.subr.mxu0 0.0
      %305 = vmatpush1.msra.mxu0 0.0
      %306 = vmatprep.subr.mxu0 0.0
      %307 = vmatpush1.msra.mxu0 0.0
      %308 = vmatprep.subr.mxu0 0.0
      %309 = vmatpush1.msra.mxu0 0.0
      %310 = vmatprep.subr.mxu0 0.0
      %311 = vmatpush1.msra.mxu0 0.0
      %312 = vmatprep.subr.mxu0 0.0
      %313 = vmatpush1.msra.mxu0 0.0
      %314 = vmatprep.subr.mxu0 0.0
      %315 = vmatpush1.msra.mxu0 0.0
      %316 = vmatprep.subr.mxu0 0.0
      %317 = vmatpush1.msra.mxu0 0.0
      %318 = vmatprep.subr.mxu0 0.0
      %319 = vmatpush1.msra.mxu0 0.0
      %320 = vmatprep.subr.mxu0 0.0
      %321 = vmatpush1.msra.mxu0 0.0
      %322 = vmatprep.subr.mxu0 0.0
      %323 = vmatpush1.msra.mxu0 0.0
      %324 = vmatprep.subr.mxu0 0.0
      %325 = vmatpush1.msra.mxu0 0.0
      %326 = vmatprep.mubr.f32.mxu0 0.0
      %v327 = vand.u32 %v160, 4294901760
      %328 = vmatmul.mubr.f32.gmra.mrb[0].mxu0 %v327
      %v329 = vpop.f32.mrb[0].mxu0
      %v330 = vadd.f32 %v239, %v329
      %v331 = vpop.f32.mrb[0].mxu0
      %332 = vmatprep.mubr.f32.mxu0 0.0
      %v333 = vand.u32 %v163, 4294901760
      %334 = vmatmul.mubr.f32.gmra.mrb[0].mxu0 %v333
      %v335 = vpop.f32.mrb[0].mxu0
      %v336 = vadd.f32 %v249, %v335
      %v337 = vpop.f32.mrb[0].mxu0
      %338 = vdwg.mxu0
      %339 = vmatprep.subr.mxu0 0.0
      %v340 = vand.u32 %v149, 4294901760
      %v341 = vsub.f32 %v149, %v340
      %342 = vmatpush1.msra.mxu0 %v341
      %343 = vmatprep.subr.mxu0 0.0
      %v344 = vand.u32 %v150, 4294901760
      %v345 = vsub.f32 %v150, %v344
      %346 = vmatpush1.msra.mxu0 %v345
      %347 = vmatprep.subr.mxu0 0.0
      %348 = vmatpush1.msra.mxu0 0.0
      %349 = vmatprep.subr.mxu0 0.0
      %350 = vmatpush1.msra.mxu0 0.0
      %351 = vmatprep.subr.mxu0 0.0
      %352 = vmatpush1.msra.mxu0 0.0
      %353 = vmatprep.subr.mxu0 0.0
      %354 = vmatpush1.msra.mxu0 0.0
      %355 = vmatprep.subr.mxu0 0.0
      %356 = vmatpush1.msra.mxu0 0.0
      %357 = vmatprep.subr.mxu0 0.0
      %358 = vmatpush1.msra.mxu0 0.0
      %359 = vmatprep.subr.mxu0 0.0
      %360 = vmatpush1.msra.mxu0 0.0
      %361 = vmatprep.subr.mxu0 0.0
      %362 = vmatpush1.msra.mxu0 0.0
      %363 = vmatprep.subr.mxu0 0.0
      %364 = vmatpush1.msra.mxu0 0.0
      %365 = vmatprep.subr.mxu0 0.0
      %366 = vmatpush1.msra.mxu0 0.0
      %367 = vmatprep.subr.mxu0 0.0
      %368 = vmatpush1.msra.mxu0 0.0
      %369 = vmatprep.subr.mxu0 0.0
      %370 = vmatpush1.msra.mxu0 0.0
      %371 = vmatprep.subr.mxu0 0.0
      %372 = vmatpush1.msra.mxu0 0.0
      %373 = vmatprep.subr.mxu0 0.0
      %374 = vmatpush1.msra.mxu0 0.0
      %375 = vmatprep.subr.mxu0 0.0
      %376 = vmatpush1.msra.mxu0 0.0
      %377 = vmatprep.subr.mxu0 0.0
      %378 = vmatpush1.msra.mxu0 0.0
      %379 = vmatprep.subr.mxu0 0.0
      %380 = vmatpush1.msra.mxu0 0.0
      %381 = vmatprep.subr.mxu0 0.0
      %382 = vmatpush1.msra.mxu0 0.0
      %383 = vmatprep.subr.mxu0 0.0
      %384 = vmatpush1.msra.mxu0 0.0
      %385 = vmatprep.subr.mxu0 0.0
      %386 = vmatpush1.msra.mxu0 0.0
      %387 = vmatprep.subr.mxu0 0.0
      %388 = vmatpush1.msra.mxu0 0.0
      %389 = vmatprep.subr.mxu0 0.0
      %390 = vmatpush1.msra.mxu0 0.0
      %391 = vmatprep.subr.mxu0 0.0
      %392 = vmatpush1.msra.mxu0 0.0
      %393 = vmatprep.subr.mxu0 0.0
      %394 = vmatpush1.msra.mxu0 0.0
      %395 = vmatprep.subr.mxu0 0.0
      %396 = vmatpush1.msra.mxu0 0.0
      %397 = vmatprep.subr.mxu0 0.0
      %398 = vmatpush1.msra.mxu0 0.0
      %399 = vmatprep.subr.mxu0 0.0
      %400 = vmatpush1.msra.mxu0 0.0
      %401 = vmatprep.subr.mxu0 0.0
      %402 = vmatpush1.msra.mxu0 0.0
      %403 = vmatprep.subr.mxu0 0.0
      %404 = vmatpush1.msra.mxu0 0.0
      %405 = vmatprep.subr.mxu0 0.0
      %406 = vmatpush1.msra.mxu0 0.0
      %407 = vmatprep.mubr.f32.mxu0 0.0
      %v408 = vand.u32 %v160, 4294901760
      %v409 = vsub.f32 %v160, %v408
      %410 = vmatmul.mubr.f32.gmra.mrb[0].mxu0 %v409
      %v411 = vpop.f32.mrb[0].mxu0
      %v412 = vadd.f32 %v330, %v411
      %v413 = vpop.f32.mrb[0].mxu0
      %414 = vmatprep.mubr.f32.mxu0 0.0
      %v415 = vand.u32 %v163, 4294901760
      %v416 = vsub.f32 %v163, %v415
      %417 = vmatmul.mubr.f32.gmra.mrb[0].mxu0 %v416
      %v418 = vpop.f32.mrb[0].mxu0
      %v419 = vadd.f32 %v336, %v418
      %v420 = vpop.f32.mrb[0].mxu0
      %421 = vdwg.mxu0
      %422 = vmatprep.subr.mxu0 0.0
      %v423 = vand.u32 %v149, 4294901760
      %424 = vmatpush1.msra.mxu0 %v423
      %425 = vmatprep.subr.mxu0 0.0
      %v426 = vand.u32 %v150, 4294901760
      %427 = vmatpush1.msra.mxu0 %v426
      %428 = vmatprep.subr.mxu0 0.0
      %429 = vmatpush1.msra.mxu0 0.0
      %430 = vmatprep.subr.mxu0 0.0
      %431 = vmatpush1.msra.mxu0 0.0
      %432 = vmatprep.subr.mxu0 0.0
      %433 = vmatpush1.msra.mxu0 0.0
      %434 = vmatprep.subr.mxu0 0.0
      %435 = vmatpush1.msra.mxu0 0.0
      %436 = vmatprep.subr.mxu0 0.0
      %437 = vmatpush1.msra.mxu0 0.0
      %438 = vmatprep.subr.mxu0 0.0
      %439 = vmatpush1.msra.mxu0 0.0
      %440 = vmatprep.subr.mxu0 0.0
      %441 = vmatpush1.msra.mxu0 0.0
      %442 = vmatprep.subr.mxu0 0.0
      %443 = vmatpush1.msra.mxu0 0.0
      %444 = vmatprep.subr.mxu0 0.0
      %445 = vmatpush1.msra.mxu0 0.0
      %446 = vmatprep.subr.mxu0 0.0
      %447 = vmatpush1.msra.mxu0 0.0
      %448 = vmatprep.subr.mxu0 0.0
      %449 = vmatpush1.msra.mxu0 0.0
      %450 = vmatprep.subr.mxu0 0.0
      %451 = vmatpush1.msra.mxu0 0.0
      %452 = vmatprep.subr.mxu0 0.0
      %453 = vmatpush1.msra.mxu0 0.0
      %454 = vmatprep.subr.mxu0 0.0
      %455 = vmatpush1.msra.mxu0 0.0
      %456 = vmatprep.subr.mxu0 0.0
      %457 = vmatpush1.msra.mxu0 0.0
      %458 = vmatprep.subr.mxu0 0.0
      %459 = vmatpush1.msra.mxu0 0.0
      %460 = vmatprep.subr.mxu0 0.0
      %461 = vmatpush1.msra.mxu0 0.0
      %462 = vmatprep.subr.mxu0 0.0
      %463 = vmatpush1.msra.mxu0 0.0
      %464 = vmatprep.subr.mxu0 0.0
      %465 = vmatpush1.msra.mxu0 0.0
      %466 = vmatprep.subr.mxu0 0.0
      %467 = vmatpush1.msra.mxu0 0.0
      %468 = vmatprep.subr.mxu0 0.0
      %469 = vmatpush1.msra.mxu0 0.0
      %470 = vmatprep.subr.mxu0 0.0
      %471 = vmatpush1.msra.mxu0 0.0
      %472 = vmatprep.subr.mxu0 0.0
      %473 = vmatpush1.msra.mxu0 0.0
      %474 = vmatprep.subr.mxu0 0.0
      %475 = vmatpush1.msra.mxu0 0.0
      %476 = vmatprep.subr.mxu0 0.0
      %477 = vmatpush1.msra.mxu0 0.0
      %478 = vmatprep.subr.mxu0 0.0
      %479 = vmatpush1.msra.mxu0 0.0
      %480 = vmatprep.subr.mxu0 0.0
      %481 = vmatpush1.msra.mxu0 0.0
      %482 = vmatprep.subr.mxu0 0.0
      %483 = vmatpush1.msra.mxu0 0.0
      %484 = vmatprep.subr.mxu0 0.0
      %485 = vmatpush1.msra.mxu0 0.0
      %486 = vmatprep.subr.mxu0 0.0
      %487 = vmatpush1.msra.mxu0 0.0
      %488 = vmatprep.mubr.f32.mxu0 0.0
      %v489 = vand.u32 %v160, 4294901760
      %v490 = vsub.f32 %v160, %v489
      %v491 = vand.u32 %v490, 4294901760
      %492 = vmatmul.mubr.f32.gmra.mrb[0].mxu0 %v491
      %v493 = vpop.f32.mrb[0].mxu0
      %v494 = vadd.f32 %v412, %v493
      %v495 = vpop.f32.mrb[0].mxu0
      %496 = vmatprep.mubr.f32.mxu0 0.0
      %v497 = vand.u32 %v163, 4294901760
      %v498 = vsub.f32 %v163, %v497
      %v499 = vand.u32 %v498, 4294901760
      %500 = vmatmul.mubr.f32.gmra.mrb[0].mxu0 %v499
      %v501 = vpop.f32.mrb[0].mxu0
      %v502 = vadd.f32 %v419, %v501
      %v503 = vpop.f32.mrb[0].mxu0
      %504 = vdwg.mxu0
      %505 = vmatprep.subr.mxu0 0.0
      %v506 = vand.u32 %v149, 4294901760
      %v507 = vsub.f32 %v149, %v506
      %v508 = vand.u32 %v507, 4294901760
      %509 = vmatpush1.msra.mxu0 %v508
      %510 = vmatprep.subr.mxu0 0.0
      %v511 = vand.u32 %v150, 4294901760
      %v512 = vsub.f32 %v150, %v511
      %v513 = vand.u32 %v512, 4294901760
      %514 = vmatpush1.msra.mxu0 %v513
      %515 = vmatprep.subr.mxu0 0.0
      %516 = vmatpush1.msra.mxu0 0.0
      %517 = vmatprep.subr.mxu0 0.0
      %518 = vmatpush1.msra.mxu0 0.0
      %519 = vmatprep.subr.mxu0 0.0
      %520 = vmatpush1.msra.mxu0 0.0
      %521 = vmatprep.subr.mxu0 0.0
      %522 = vmatpush1.msra.mxu0 0.0
      %523 = vmatprep.subr.mxu0 0.0
      %524 = vmatpush1.msra.mxu0 0.0
      %525 = vmatprep.subr.mxu0 0.0
      %526 = vmatpush1.msra.mxu0 0.0
      %527 = vmatprep.subr.mxu0 0.0
      %528 = vmatpush1.msra.mxu0 0.0
      %529 = vmatprep.subr.mxu0 0.0
      %530 = vmatpush1.msra.mxu0 0.0
      %531 = vmatprep.subr.mxu0 0.0
      %532 = vmatpush1.msra.mxu0 0.0
      %533 = vmatprep.subr.mxu0 0.0
      %534 = vmatpush1.msra.mxu0 0.0
      %535 = vmatprep.subr.mxu0 0.0
      %536 = vmatpush1.msra.mxu0 0.0
      %537 = vmatprep.subr.mxu0 0.0
      %538 = vmatpush1.msra.mxu0 0.0
      %539 = vmatprep.subr.mxu0 0.0
      %540 = vmatpush1.msra.mxu0 0.0
      %541 = vmatprep.subr.mxu0 0.0
      %542 = vmatpush1.msra.mxu0 0.0
      %543 = vmatprep.subr.mxu0 0.0
      %544 = vmatpush1.msra.mxu0 0.0
      %545 = vmatprep.subr.mxu0 0.0
      %546 = vmatpush1.msra.mxu0 0.0
      %547 = vmatprep.subr.mxu0 0.0
      %548 = vmatpush1.msra.mxu0 0.0
      %549 = vmatprep.subr.mxu0 0.0
      %550 = vmatpush1.msra.mxu0 0.0
      %551 = vmatprep.subr.mxu0 0.0
      %552 = vmatpush1.msra.mxu0 0.0
      %553 = vmatprep.subr.mxu0 0.0
      %554 = vmatpush1.msra.mxu0 0.0
      %555 = vmatprep.subr.mxu0 0.0
      %556 = vmatpush1.msra.mxu0 0.0
      %557 = vmatprep.subr.mxu0 0.0
      %558 = vmatpush1.msra.mxu0 0.0
      %559 = vmatprep.subr.mxu0 0.0
      %560 = vmatpush1.msra.mxu0 0.0
      %561 = vmatprep.subr.mxu0 0.0
      %562 = vmatpush1.msra.mxu0 0.0
      %563 = vmatprep.subr.mxu0 0.0
      %564 = vmatpush1.msra.mxu0 0.0
      %565 = vmatprep.subr.mxu0 0.0
      %566 = vmatpush1.msra.mxu0 0.0
      %567 = vmatprep.subr.mxu0 0.0
      %568 = vmatpush1.msra.mxu0 0.0
      %569 = vmatprep.subr.mxu0 0.0
      %570 = vmatpush1.msra.mxu0 0.0
      %571 = vmatprep.subr.mxu0 0.0
      %572 = vmatpush1.msra.mxu0 0.0
      %573 = vmatprep.subr.mxu0 0.0
      %574 = vmatpush1.msra.mxu0 0.0
      %575 = vmatprep.mubr.f32.mxu0 0.0
      %v576 = vand.u32 %v160, 4294901760
      %577 = vmatmul.mubr.f32.gmra.mrb[0].mxu0 %v576
      %v578 = vpop.f32.mrb[0].mxu0
      %v579 = vadd.f32 %v494, %v578
      %v580 = vpop.f32.mrb[0].mxu0
      %581 = vmatprep.mubr.f32.mxu0 0.0
      %v582 = vand.u32 %v163, 4294901760
      %583 = vmatmul.mubr.f32.gmra.mrb[0].mxu0 %v582
      %v584 = vpop.f32.mrb[0].mxu0
      %v585 = vadd.f32 %v502, %v584
      %v586 = vpop.f32.mrb[0].mxu0
      %587 = vdwg.mxu0
      %588 = vmatprep.subr.mxu0 0.0
      %v589 = vand.u32 %v149, 4294901760
      %590 = vmatpush1.msra.mxu0 %v589
      %591 = vmatprep.subr.mxu0 0.0
      %v592 = vand.u32 %v150, 4294901760
      %593 = vmatpush1.msra.mxu0 %v592
      %594 = vmatprep.subr.mxu0 0.0
      %595 = vmatpush1.msra.mxu0 0.0
      %596 = vmatprep.subr.mxu0 0.0
      %597 = vmatpush1.msra.mxu0 0.0
      %598 = vmatprep.subr.mxu0 0.0
      %599 = vmatpush1.msra.mxu0 0.0
      %600 = vmatprep.subr.mxu0 0.0
      %601 = vmatpush1.msra.mxu0 0.0
      %602 = vmatprep.subr.mxu0 0.0
      %603 = vmatpush1.msra.mxu0 0.0
      %604 = vmatprep.subr.mxu0 0.0
      %605 = vmatpush1.msra.mxu0 0.0
      %606 = vmatprep.subr.mxu0 0.0
      %607 = vmatpush1.msra.mxu0 0.0
      %608 = vmatprep.subr.mxu0 0.0
      %609 = vmatpush1.msra.mxu0 0.0
      %610 = vmatprep.subr.mxu0 0.0
      %611 = vmatpush1.msra.mxu0 0.0
      %612 = vmatprep.subr.mxu0 0.0
      %613 = vmatpush1.msra.mxu0 0.0
      %614 = vmatprep.subr.mxu0 0.0
      %615 = vmatpush1.msra.mxu0 0.0
      %616 = vmatprep.subr.mxu0 0.0
      %617 = vmatpush1.msra.mxu0 0.0
      %618 = vmatprep.subr.mxu0 0.0
      %619 = vmatpush1.msra.mxu0 0.0
      %620 = vmatprep.subr.mxu0 0.0
      %621 = vmatpush1.msra.mxu0 0.0
      %622 = vmatprep.subr.mxu0 0.0
      %623 = vmatpush1.msra.mxu0 0.0
      %624 = vmatprep.subr.mxu0 0.0
      %625 = vmatpush1.msra.mxu0 0.0
      %626 = vmatprep.subr.mxu0 0.0
      %627 = vmatpush1.msra.mxu0 0.0
      %628 = vmatprep.subr.mxu0 0.0
      %629 = vmatpush1.msra.mxu0 0.0
      %630 = vmatprep.subr.mxu0 0.0
      %631 = vmatpush1.msra.mxu0 0.0
      %632 = vmatprep.subr.mxu0 0.0
      %633 = vmatpush1.msra.mxu0 0.0
      %634 = vmatprep.subr.mxu0 0.0
      %635 = vmatpush1.msra.mxu0 0.0
      %636 = vmatprep.subr.mxu0 0.0
      %637 = vmatpush1.msra.mxu0 0.0
      %638 = vmatprep.subr.mxu0 0.0
      %639 = vmatpush1.msra.mxu0 0.0
      %640 = vmatprep.subr.mxu0 0.0
      %641 = vmatpush1.msra.mxu0 0.0
      %642 = vmatprep.subr.mxu0 0.0
      %643 = vmatpush1.msra.mxu0 0.0
      %644 = vmatprep.subr.mxu0 0.0
      %645 = vmatpush1.msra.mxu0 0.0
      %646 = vmatprep.subr.mxu0 0.0
      %647 = vmatpush1.msra.mxu0 0.0
      %648 = vmatprep.subr.mxu0 0.0
      %649 = vmatpush1.msra.mxu0 0.0
      %650 = vmatprep.subr.mxu0 0.0
      %651 = vmatpush1.msra.mxu0 0.0
      %652 = vmatprep.subr.mxu0 0.0
      %653 = vmatpush1.msra.mxu0 0.0
      %654 = vmatprep.mubr.f32.mxu0 0.0
      %v655 = vand.u32 %v160, 4294901760
      %656 = vmatmul.mubr.f32.gmra.mrb[0].mxu0 %v655
      %v657 = vpop.f32.mrb[0].mxu0
      %v658 = vadd.f32 %v579, %v657
      %v659 = vpop.f32.mrb[0].mxu0
      %660 = vmatprep.mubr.f32.mxu0 0.0
      %v661 = vand.u32 %v163, 4294901760
      %662 = vmatmul.mubr.f32.gmra.mrb[0].mxu0 %v661
      %v663 = vpop.f32.mrb[0].mxu0
      %v664 = vadd.f32 %v585, %v663
      %v665 = vpop.f32.mrb[0].mxu0
      %666 = vdwg.mxu0
      %667 = vmatprep.subr.mxu0 0.0
      %v668 = vand.u32 %v156, 4294901760
      %669 = vmatpush1.msra.mxu0 %v668
      %670 = vmatprep.subr.mxu0 0.0
      %v671 = vand.u32 %v157, 4294901760
      %672 = vmatpush1.msra.mxu0 %v671
      %673 = vmatprep.subr.mxu0 0.0
      %674 = vmatpush1.msra.mxu0 0.0
      %675 = vmatprep.subr.mxu0 0.0
      %676 = vmatpush1.msra.mxu0 0.0
      %677 = vmatprep.subr.mxu0 0.0
      %678 = vmatpush1.msra.mxu0 0.0
      %679 = vmatprep.subr.mxu0 0.0
      %680 = vmatpush1.msra.mxu0 0.0
      %681 = vmatprep.subr.mxu0 0.0
      %682 = vmatpush1.msra.mxu0 0.0
      %683 = vmatprep.subr.mxu0 0.0
      %684 = vmatpush1.msra.mxu0 0.0
      %685 = vmatprep.subr.mxu0 0.0
      %686 = vmatpush1.msra.mxu0 0.0
      %687 = vmatprep.subr.mxu0 0.0
      %688 = vmatpush1.msra.mxu0 0.0
      %689 = vmatprep.subr.mxu0 0.0
      %690 = vmatpush1.msra.mxu0 0.0
      %691 = vmatprep.subr.mxu0 0.0
      %692 = vmatpush1.msra.mxu0 0.0
      %693 = vmatprep.subr.mxu0 0.0
      %694 = vmatpush1.msra.mxu0 0.0
      %695 = vmatprep.subr.mxu0 0.0
      %696 = vmatpush1.msra.mxu0 0.0
      %697 = vmatprep.subr.mxu0 0.0
      %698 = vmatpush1.msra.mxu0 0.0
      %699 = vmatprep.subr.mxu0 0.0
      %700 = vmatpush1.msra.mxu0 0.0
      %701 = vmatprep.subr.mxu0 0.0
      %702 = vmatpush1.msra.mxu0 0.0
      %703 = vmatprep.subr.mxu0 0.0
      %704 = vmatpush1.msra.mxu0 0.0
      %705 = vmatprep.subr.mxu0 0.0
      %706 = vmatpush1.msra.mxu0 0.0
      %707 = vmatprep.subr.mxu0 0.0
      %708 = vmatpush1.msra.mxu0 0.0
      %709 = vmatprep.subr.mxu0 0.0
      %710 = vmatpush1.msra.mxu0 0.0
      %711 = vmatprep.subr.mxu0 0.0
      %712 = vmatpush1.msra.mxu0 0.0
      %713 = vmatprep.subr.mxu0 0.0
      %714 = vmatpush1.msra.mxu0 0.0
      %715 = vmatprep.subr.mxu0 0.0
      %716 = vmatpush1.msra.mxu0 0.0
      %717 = vmatprep.subr.mxu0 0.0
      %718 = vmatpush1.msra.mxu0 0.0
      %719 = vmatprep.subr.mxu0 0.0
      %720 = vmatpush1.msra.mxu0 0.0
      %721 = vmatprep.subr.mxu0 0.0
      %722 = vmatpush1.msra.mxu0 0.0
      %723 = vmatprep.subr.mxu0 0.0
      %724 = vmatpush1.msra.mxu0 0.0
      %725 = vmatprep.subr.mxu0 0.0
      %726 = vmatpush1.msra.mxu0 0.0
      %727 = vmatprep.subr.mxu0 0.0
      %728 = vmatpush1.msra.mxu0 0.0
      %729 = vmatprep.subr.mxu0 0.0
      %730 = vmatpush1.msra.mxu0 0.0
      %731 = vmatprep.subr.mxu0 0.0
      %732 = vmatpush1.msra.mxu0 0.0
      %733 = vmatprep.mubr.f32.mxu0 0.0
      %v734 = vand.u32 %v160, 4294901760
      %v735 = vsub.f32 %v160, %v734
      %v736 = vand.u32 %v735, 4294901760
      %v737 = vsub.f32 %v735, %v736
      %v738 = vand.u32 %v737, 4294901760
      %739 = vmatmul.mubr.f32.gmra.mrb[0].mxu0 %v738
      %v740 = vpop.f32.mrb[0].mxu0
      %v741 = vadd.f32 0.0, %v740
      %v742 = vpop.f32.mrb[0].mxu0
      %743 = vmatprep.mubr.f32.mxu0 0.0
      %v744 = vand.u32 %v163, 4294901760
      %v745 = vsub.f32 %v163, %v744
      %v746 = vand.u32 %v745, 4294901760
      %v747 = vsub.f32 %v745, %v746
      %v748 = vand.u32 %v747, 4294901760
      %749 = vmatmul.mubr.f32.gmra.mrb[0].mxu0 %v748
      %v750 = vpop.f32.mrb[0].mxu0
      %v751 = vadd.f32 0.0, %v750
      %v752 = vpop.f32.mrb[0].mxu0
      %753 = vdwg.mxu0
      %754 = vmatprep.subr.mxu0 0.0
      %v755 = vand.u32 %v156, 4294901760
      %v756 = vsub.f32 %v156, %v755
      %v757 = vand.u32 %v756, 4294901760
      %v758 = vsub.f32 %v756, %v757
      %v759 = vand.u32 %v758, 4294901760
      %760 = vmatpush1.msra.mxu0 %v759
      %761 = vmatprep.subr.mxu0 0.0
      %v762 = vand.u32 %v157, 4294901760
      %v763 = vsub.f32 %v157, %v762
      %v764 = vand.u32 %v763, 4294901760
      %v765 = vsub.f32 %v763, %v764
      %v766 = vand.u32 %v765, 4294901760
      %767 = vmatpush1.msra.mxu0 %v766
      %768 = vmatprep.subr.mxu0 0.0
      %769 = vmatpush1.msra.mxu0 0.0
      %770 = vmatprep.subr.mxu0 0.0
      %771 = vmatpush1.msra.mxu0 0.0
      %772 = vmatprep.subr.mxu0 0.0
      %773 = vmatpush1.msra.mxu0 0.0
      %774 = vmatprep.subr.mxu0 0.0
      %775 = vmatpush1.msra.mxu0 0.0
      %776 = vmatprep.subr.mxu0 0.0
      %777 = vmatpush1.msra.mxu0 0.0
      %778 = vmatprep.subr.mxu0 0.0
      %779 = vmatpush1.msra.mxu0 0.0
      %780 = vmatprep.subr.mxu0 0.0
      %781 = vmatpush1.msra.mxu0 0.0
      %782 = vmatprep.subr.mxu0 0.0
      %783 = vmatpush1.msra.mxu0 0.0
      %784 = vmatprep.subr.mxu0 0.0
      %785 = vmatpush1.msra.mxu0 0.0
      %786 = vmatprep.subr.mxu0 0.0
      %787 = vmatpush1.msra.mxu0 0.0
      %788 = vmatprep.subr.mxu0 0.0
      %789 = vmatpush1.msra.mxu0 0.0
      %790 = vmatprep.subr.mxu0 0.0
      %791 = vmatpush1.msra.mxu0 0.0
      %792 = vmatprep.subr.mxu0 0.0
      %793 = vmatpush1.msra.mxu0 0.0
      %794 = vmatprep.subr.mxu0 0.0
      %795 = vmatpush1.msra.mxu0 0.0
      %796 = vmatprep.subr.mxu0 0.0
      %797 = vmatpush1.msra.mxu0 0.0
      %798 = vmatprep.subr.mxu0 0.0
      %799 = vmatpush1.msra.mxu0 0.0
      %800 = vmatprep.subr.mxu0 0.0
      %801 = vmatpush1.msra.mxu0 0.0
      %802 = vmatprep.subr.mxu0 0.0
      %803 = vmatpush1.msra.mxu0 0.0
      %804 = vmatprep.subr.mxu0 0.0
      %805 = vmatpush1.msra.mxu0 0.0
      %806 = vmatprep.subr.mxu0 0.0
      %807 = vmatpush1.msra.mxu0 0.0
      %808 = vmatprep.subr.mxu0 0.0
      %809 = vmatpush1.msra.mxu0 0.0
      %810 = vmatprep.subr.mxu0 0.0
      %811 = vmatpush1.msra.mxu0 0.0
      %812 = vmatprep.subr.mxu0 0.0
      %813 = vmatpush1.msra.mxu0 0.0
      %814 = vmatprep.subr.mxu0 0.0
      %815 = vmatpush1.msra.mxu0 0.0
      %816 = vmatprep.subr.mxu0 0.0
      %817 = vmatpush1.msra.mxu0 0.0
      %818 = vmatprep.subr.mxu0 0.0
      %819 = vmatpush1.msra.mxu0 0.0
      %820 = vmatprep.subr.mxu0 0.0
      %821 = vmatpush1.msra.mxu0 0.0
      %822 = vmatprep.subr.mxu0 0.0
      %823 = vmatpush1.msra.mxu0 0.0
      %824 = vmatprep.subr.mxu0 0.0
      %825 = vmatpush1.msra.mxu0 0.0
      %826 = vmatprep.subr.mxu0 0.0
      %827 = vmatpush1.msra.mxu0 0.0
      %828 = vmatprep.mubr.f32.mxu0 0.0
      %v829 = vand.u32 %v160, 4294901760
      %830 = vmatmul.mubr.f32.gmra.mrb[0].mxu0 %v829
      %v831 = vpop.f32.mrb[0].mxu0
      %v832 = vadd.f32 %v741, %v831
      %v833 = vpop.f32.mrb[0].mxu0
      %834 = vmatprep.mubr.f32.mxu0 0.0
      %v835 = vand.u32 %v163, 4294901760
      %836 = vmatmul.mubr.f32.gmra.mrb[0].mxu0 %v835
      %v837 = vpop.f32.mrb[0].mxu0
      %v838 = vadd.f32 %v751, %v837
      %v839 = vpop.f32.mrb[0].mxu0
      %840 = vdwg.mxu0
      %841 = vmatprep.subr.mxu0 0.0
      %v842 = vand.u32 %v156, 4294901760
      %v843 = vsub.f32 %v156, %v842
      %844 = vmatpush1.msra.mxu0 %v843
      %845 = vmatprep.subr.mxu0 0.0
      %v846 = vand.u32 %v157, 4294901760
      %v847 = vsub.f32 %v157, %v846
      %848 = vmatpush1.msra.mxu0 %v847
      %849 = vmatprep.subr.mxu0 0.0
      %850 = vmatpush1.msra.mxu0 0.0
      %851 = vmatprep.subr.mxu0 0.0
      %852 = vmatpush1.msra.mxu0 0.0
      %853 = vmatprep.subr.mxu0 0.0
      %854 = vmatpush1.msra.mxu0 0.0
      %855 = vmatprep.subr.mxu0 0.0
      %856 = vmatpush1.msra.mxu0 0.0
      %857 = vmatprep.subr.mxu0 0.0
      %858 = vmatpush1.msra.mxu0 0.0
      %859 = vmatprep.subr.mxu0 0.0
      %860 = vmatpush1.msra.mxu0 0.0
      %861 = vmatprep.subr.mxu0 0.0
      %862 = vmatpush1.msra.mxu0 0.0
      %863 = vmatprep.subr.mxu0 0.0
      %864 = vmatpush1.msra.mxu0 0.0
      %865 = vmatprep.subr.mxu0 0.0
      %866 = vmatpush1.msra.mxu0 0.0
      %867 = vmatprep.subr.mxu0 0.0
      %868 = vmatpush1.msra.mxu0 0.0
      %869 = vmatprep.subr.mxu0 0.0
      %870 = vmatpush1.msra.mxu0 0.0
      %871 = vmatprep.subr.mxu0 0.0
      %872 = vmatpush1.msra.mxu0 0.0
      %873 = vmatprep.subr.mxu0 0.0
      %874 = vmatpush1.msra.mxu0 0.0
      %875 = vmatprep.subr.mxu0 0.0
      %876 = vmatpush1.msra.mxu0 0.0
      %877 = vmatprep.subr.mxu0 0.0
      %878 = vmatpush1.msra.mxu0 0.0
      %879 = vmatprep.subr.mxu0 0.0
      %880 = vmatpush1.msra.mxu0 0.0
      %881 = vmatprep.subr.mxu0 0.0
      %882 = vmatpush1.msra.mxu0 0.0
      %883 = vmatprep.subr.mxu0 0.0
      %884 = vmatpush1.msra.mxu0 0.0
      %885 = vmatprep.subr.mxu0 0.0
      %886 = vmatpush1.msra.mxu0 0.0
      %887 = vmatprep.subr.mxu0 0.0
      %888 = vmatpush1.msra.mxu0 0.0
      %889 = vmatprep.subr.mxu0 0.0
      %890 = vmatpush1.msra.mxu0 0.0
      %891 = vmatprep.subr.mxu0 0.0
      %892 = vmatpush1.msra.mxu0 0.0
      %893 = vmatprep.subr.mxu0 0.0
      %894 = vmatpush1.msra.mxu0 0.0
      %895 = vmatprep.subr.mxu0 0.0
      %896 = vmatpush1.msra.mxu0 0.0
      %897 = vmatprep.subr.mxu0 0.0
      %898 = vmatpush1.msra.mxu0 0.0
      %899 = vmatprep.subr.mxu0 0.0
      %900 = vmatpush1.msra.mxu0 0.0
      %901 = vmatprep.subr.mxu0 0.0
      %902 = vmatpush1.msra.mxu0 0.0
      %903 = vmatprep.subr.mxu0 0.0
      %904 = vmatpush1.msra.mxu0 0.0
      %905 = vmatprep.subr.mxu0 0.0
      %906 = vmatpush1.msra.mxu0 0.0
      %907 = vmatprep.subr.mxu0 0.0
      %908 = vmatpush1.msra.mxu0 0.0
      %909 = vmatprep.mubr.f32.mxu0 0.0
      %v910 = vand.u32 %v160, 4294901760
      %v911 = vsub.f32 %v160, %v910
      %912 = vmatmul.mubr.f32.gmra.mrb[0].mxu0 %v911
      %v913 = vpop.f32.mrb[0].mxu0
      %v914 = vadd.f32 %v832, %v913
      %v915 = vpop.f32.mrb[0].mxu0
      %916 = vmatprep.mubr.f32.mxu0 0.0
      %v917 = vand.u32 %v163, 4294901760
      %v918 = vsub.f32 %v163, %v917
      %919 = vmatmul.mubr.f32.gmra.mrb[0].mxu0 %v918
      %v920 = vpop.f32.mrb[0].mxu0
      %v921 = vadd.f32 %v838, %v920
      %v922 = vpop.f32.mrb[0].mxu0
      %923 = vdwg.mxu0
      %924 = vmatprep.subr.mxu0 0.0
      %v925 = vand.u32 %v156, 4294901760
      %926 = vmatpush1.msra.mxu0 %v925
      %927 = vmatprep.subr.mxu0 0.0
      %v928 = vand.u32 %v157, 4294901760
      %929 = vmatpush1.msra.mxu0 %v928
      %930 = vmatprep.subr.mxu0 0.0
      %931 = vmatpush1.msra.mxu0 0.0
      %932 = vmatprep.subr.mxu0 0.0
      %933 = vmatpush1.msra.mxu0 0.0
      %934 = vmatprep.subr.mxu0 0.0
      %935 = vmatpush1.msra.mxu0 0.0
      %936 = vmatprep.subr.mxu0 0.0
      %937 = vmatpush1.msra.mxu0 0.0
      %938 = vmatprep.subr.mxu0 0.0
      %939 = vmatpush1.msra.mxu0 0.0
      %940 = vmatprep.subr.mxu0 0.0
      %941 = vmatpush1.msra.mxu0 0.0
      %942 = vmatprep.subr.mxu0 0.0
      %943 = vmatpush1.msra.mxu0 0.0
      %944 = vmatprep.subr.mxu0 0.0
      %945 = vmatpush1.msra.mxu0 0.0
      %946 = vmatprep.subr.mxu0 0.0
      %947 = vmatpush1.msra.mxu0 0.0
      %948 = vmatprep.subr.mxu0 0.0
      %949 = vmatpush1.msra.mxu0 0.0
      %950 = vmatprep.subr.mxu0 0.0
      %951 = vmatpush1.msra.mxu0 0.0
      %952 = vmatprep.subr.mxu0 0.0
      %953 = vmatpush1.msra.mxu0 0.0
      %954 = vmatprep.subr.mxu0 0.0
      %955 = vmatpush1.msra.mxu0 0.0
      %956 = vmatprep.subr.mxu0 0.0
      %957 = vmatpush1.msra.mxu0 0.0
      %958 = vmatprep.subr.mxu0 0.0
      %959 = vmatpush1.msra.mxu0 0.0
      %960 = vmatprep.subr.mxu0 0.0
      %961 = vmatpush1.msra.mxu0 0.0
      %962 = vmatprep.subr.mxu0 0.0
      %963 = vmatpush1.msra.mxu0 0.0
      %964 = vmatprep.subr.mxu0 0.0
      %965 = vmatpush1.msra.mxu0 0.0
      %966 = vmatprep.subr.mxu0 0.0
      %967 = vmatpush1.msra.mxu0 0.0
      %968 = vmatprep.subr.mxu0 0.0
      %969 = vmatpush1.msra.mxu0 0.0
      %970 = vmatprep.subr.mxu0 0.0
      %971 = vmatpush1.msra.mxu0 0.0
      %972 = vmatprep.subr.mxu0 0.0
      %973 = vmatpush1.msra.mxu0 0.0
      %974 = vmatprep.subr.mxu0 0.0
      %975 = vmatpush1.msra.mxu0 0.0
      %976 = vmatprep.subr.mxu0 0.0
      %977 = vmatpush1.msra.mxu0 0.0
      %978 = vmatprep.subr.mxu0 0.0
      %979 = vmatpush1.msra.mxu0 0.0
      %980 = vmatprep.subr.mxu0 0.0
      %981 = vmatpush1.msra.mxu0 0.0
      %982 = vmatprep.subr.mxu0 0.0
      %983 = vmatpush1.msra.mxu0 0.0
      %984 = vmatprep.subr.mxu0 0.0
      %985 = vmatpush1.msra.mxu0 0.0
      %986 = vmatprep.subr.mxu0 0.0
      %987 = vmatpush1.msra.mxu0 0.0
      %988 = vmatprep.subr.mxu0 0.0
      %989 = vmatpush1.msra.mxu0 0.0
      %990 = vmatprep.mubr.f32.mxu0 0.0
      %v991 = vand.u32 %v160, 4294901760
      %v992 = vsub.f32 %v160, %v991
      %v993 = vand.u32 %v992, 4294901760
      %994 = vmatmul.mubr.f32.gmra.mrb[0].mxu0 %v993
      %v995 = vpop.f32.mrb[0].mxu0
      %v996 = vadd.f32 %v914, %v995
      %v997 = vpop.f32.mrb[0].mxu0
      %998 = vmatprep.mubr.f32.mxu0 0.0
      %v999 = vand.u32 %v163, 4294901760
      %v1000 = vsub.f32 %v163, %v999
      %v1001 = vand.u32 %v1000, 4294901760
      %1002 = vmatmul.mubr.f32.gmra.mrb[0].mxu0 %v1001
      %v1003 = vpop.f32.mrb[0].mxu0
      %v1004 = vadd.f32 %v921, %v1003
      %v1005 = vpop.f32.mrb[0].mxu0
      %1006 = vdwg.mxu0
      %1007 = vmatprep.subr.mxu0 0.0
      %v1008 = vand.u32 %v156, 4294901760
      %v1009 = vsub.f32 %v156, %v1008
      %v1010 = vand.u32 %v1009, 4294901760
      %1011 = vmatpush1.msra.mxu0 %v1010
      %1012 = vmatprep.subr.mxu0 0.0
      %v1013 = vand.u32 %v157, 4294901760
      %v1014 = vsub.f32 %v157, %v1013
      %v1015 = vand.u32 %v1014, 4294901760
      %1016 = vmatpush1.msra.mxu0 %v1015
      %1017 = vmatprep.subr.mxu0 0.0
      %1018 = vmatpush1.msra.mxu0 0.0
      %1019 = vmatprep.subr.mxu0 0.0
      %1020 = vmatpush1.msra.mxu0 0.0
      %1021 = vmatprep.subr.mxu0 0.0
      %1022 = vmatpush1.msra.mxu0 0.0
      %1023 = vmatprep.subr.mxu0 0.0
      %1024 = vmatpush1.msra.mxu0 0.0
      %1025 = vmatprep.subr.mxu0 0.0
      %1026 = vmatpush1.msra.mxu0 0.0
      %1027 = vmatprep.subr.mxu0 0.0
      %1028 = vmatpush1.msra.mxu0 0.0
      %1029 = vmatprep.subr.mxu0 0.0
      %1030 = vmatpush1.msra.mxu0 0.0
      %1031 = vmatprep.subr.mxu0 0.0
      %1032 = vmatpush1.msra.mxu0 0.0
      %1033 = vmatprep.subr.mxu0 0.0
      %1034 = vmatpush1.msra.mxu0 0.0
      %1035 = vmatprep.subr.mxu0 0.0
      %1036 = vmatpush1.msra.mxu0 0.0
      %1037 = vmatprep.subr.mxu0 0.0
      %1038 = vmatpush1.msra.mxu0 0.0
      %1039 = vmatprep.subr.mxu0 0.0
      %1040 = vmatpush1.msra.mxu0 0.0
      %1041 = vmatprep.subr.mxu0 0.0
      %1042 = vmatpush1.msra.mxu0 0.0
      %1043 = vmatprep.subr.mxu0 0.0
      %1044 = vmatpush1.msra.mxu0 0.0
      %1045 = vmatprep.subr.mxu0 0.0
      %1046 = vmatpush1.msra.mxu0 0.0
      %1047 = vmatprep.subr.mxu0 0.0
      %1048 = vmatpush1.msra.mxu0 0.0
      %1049 = vmatprep.subr.mxu0 0.0
      %1050 = vmatpush1.msra.mxu0 0.0
      %1051 = vmatprep.subr.mxu0 0.0
      %1052 = vmatpush1.msra.mxu0 0.0
      %1053 = vmatprep.subr.mxu0 0.0
      %1054 = vmatpush1.msra.mxu0 0.0
      %1055 = vmatprep.subr.mxu0 0.0
      %1056 = vmatpush1.msra.mxu0 0.0
      %1057 = vmatprep.subr.mxu0 0.0
      %1058 = vmatpush1.msra.mxu0 0.0
      %1059 = vmatprep.subr.mxu0 0.0
      %1060 = vmatpush1.msra.mxu0 0.0
      %1061 = vmatprep.subr.mxu0 0.0
      %1062 = vmatpush1.msra.mxu0 0.0
      %1063 = vmatprep.subr.mxu0 0.0
      %1064 = vmatpush1.msra.mxu0 0.0
      %1065 = vmatprep.subr.mxu0 0.0
      %1066 = vmatpush1.msra.mxu0 0.0
      %1067 = vmatprep.subr.mxu0 0.0
      %1068 = vmatpush1.msra.mxu0 0.0
      %1069 = vmatprep.subr.mxu0 0.0
      %1070 = vmatpush1.msra.mxu0 0.0
      %1071 = vmatprep.subr.mxu0 0.0
      %1072 = vmatpush1.msra.mxu0 0.0
      %1073 = vmatprep.subr.mxu0 0.0
      %1074 = vmatpush1.msra.mxu0 0.0
      %1075 = vmatprep.subr.mxu0 0.0
      %1076 = vmatpush1.msra.mxu0 0.0
      %1077 = vmatprep.mubr.f32.mxu0 0.0
      %v1078 = vand.u32 %v160, 4294901760
      %1079 = vmatmul.mubr.f32.gmra.mrb[0].mxu0 %v1078
      %v1080 = vpop.f32.mrb[0].mxu0
      %v1081 = vadd.f32 %v996, %v1080
      %v1082 = vpop.f32.mrb[0].mxu0
      %1083 = vmatprep.mubr.f32.mxu0 0.0
      %v1084 = vand.u32 %v163, 4294901760
      %1085 = vmatmul.mubr.f32.gmra.mrb[0].mxu0 %v1084
      %v1086 = vpop.f32.mrb[0].mxu0
      %v1087 = vadd.f32 %v1004, %v1086
      %v1088 = vpop.f32.mrb[0].mxu0
      %1089 = vdwg.mxu0
      %1090 = vmatprep.subr.mxu0 0.0
      %v1091 = vand.u32 %v156, 4294901760
      %1092 = vmatpush1.msra.mxu0 %v1091
      %1093 = vmatprep.subr.mxu0 0.0
      %v1094 = vand.u32 %v157, 4294901760
      %1095 = vmatpush1.msra.mxu0 %v1094
      %1096 = vmatprep.subr.mxu0 0.0
      %1097 = vmatpush1.msra.mxu0 0.0
      %1098 = vmatprep.subr.mxu0 0.0
      %1099 = vmatpush1.msra.mxu0 0.0
      %1100 = vmatprep.subr.mxu0 0.0
      %1101 = vmatpush1.msra.mxu0 0.0
      %1102 = vmatprep.subr.mxu0 0.0
      %1103 = vmatpush1.msra.mxu0 0.0
      %1104 = vmatprep.subr.mxu0 0.0
      %1105 = vmatpush1.msra.mxu0 0.0
      %1106 = vmatprep.subr.mxu0 0.0
      %1107 = vmatpush1.msra.mxu0 0.0
      %1108 = vmatprep.subr.mxu0 0.0
      %1109 = vmatpush1.msra.mxu0 0.0
      %1110 = vmatprep.subr.mxu0 0.0
      %1111 = vmatpush1.msra.mxu0 0.0
      %1112 = vmatprep.subr.mxu0 0.0
      %1113 = vmatpush1.msra.mxu0 0.0
      %1114 = vmatprep.subr.mxu0 0.0
      %1115 = vmatpush1.msra.mxu0 0.0
      %1116 = vmatprep.subr.mxu0 0.0
      %1117 = vmatpush1.msra.mxu0 0.0
      %1118 = vmatprep.subr.mxu0 0.0
      %1119 = vmatpush1.msra.mxu0 0.0
      %1120 = vmatprep.subr.mxu0 0.0
      %1121 = vmatpush1.msra.mxu0 0.0
      %1122 = vmatprep.subr.mxu0 0.0
      %1123 = vmatpush1.msra.mxu0 0.0
      %1124 = vmatprep.subr.mxu0 0.0
      %1125 = vmatpush1.msra.mxu0 0.0
      %1126 = vmatprep.subr.mxu0 0.0
      %1127 = vmatpush1.msra.mxu0 0.0
      %1128 = vmatprep.subr.mxu0 0.0
      %1129 = vmatpush1.msra.mxu0 0.0
      %1130 = vmatprep.subr.mxu0 0.0
      %1131 = vmatpush1.msra.mxu0 0.0
      %1132 = vmatprep.subr.mxu0 0.0
      %1133 = vmatpush1.msra.mxu0 0.0
      %1134 = vmatprep.subr.mxu0 0.0
      %1135 = vmatpush1.msra.mxu0 0.0
      %1136 = vmatprep.subr.mxu0 0.0
      %1137 = vmatpush1.msra.mxu0 0.0
      %1138 = vmatprep.subr.mxu0 0.0
      %1139 = vmatpush1.msra.mxu0 0.0
      %1140 = vmatprep.subr.mxu0 0.0
      %1141 = vmatpush1.msra.mxu0 0.0
      %1142 = vmatprep.subr.mxu0 0.0
      %1143 = vmatpush1.msra.mxu0 0.0
      %1144 = vmatprep.subr.mxu0 0.0
      %1145 = vmatpush1.msra.mxu0 0.0
      %1146 = vmatprep.subr.mxu0 0.0
      %1147 = vmatpush1.msra.mxu0 0.0
      %1148 = vmatprep.subr.mxu0 0.0
      %1149 = vmatpush1.msra.mxu0 0.0
      %1150 = vmatprep.subr.mxu0 0.0
      %1151 = vmatpush1.msra.mxu0 0.0
      %1152 = vmatprep.subr.mxu0 0.0
      %1153 = vmatpush1.msra.mxu0 0.0
      %1154 = vmatprep.subr.mxu0 0.0
      %1155 = vmatpush1.msra.mxu0 0.0
      %1156 = vmatprep.mubr.f32.mxu0 0.0
      %v1157 = vand.u32 %v160, 4294901760
      %1158 = vmatmul.mubr.f32.gmra.mrb[0].mxu0 %v1157
      %v1159 = vpop.f32.mrb[0].mxu0
      %v1160 = vadd.f32 %v1081, %v1159
      %v1161 = vpop.f32.mrb[0].mxu0
      %1162 = vmatprep.mubr.f32.mxu0 0.0
      %v1163 = vand.u32 %v163, 4294901760
      %1164 = vmatmul.mubr.f32.gmra.mrb[0].mxu0 %v1163
      %v1165 = vpop.f32.mrb[0].mxu0
      %v1166 = vadd.f32 %v1087, %v1165
      %v1167 = vpop.f32.mrb[0].mxu0
      %1168 = vdwg.mxu0
      %v1169 = vmax.f32 %v658, %v1160
      %v1170 = vmax.f32 %v664, %v1166
      %vm1171 = vcmask 64512
      %1172 = vst.msk [vmem:[%s125] sm:$0xff] %vm1171, %v1169
      %1173 = vst.msk [vmem:[%s125 + $0x8] sm:$0xff] %vm1171, %v1170
      %s1174 = smul.u32 2, %s19
      %p1175 = scmp.lt.s32.totalorder %s1174, 7
      %s1176 = scalar_select %p1175, %s1174, 7
      %s1177 = smul.addr %s1176, 8
      %s1178 = scalar_lea.vmem %s2, %s1177
      // Predicated region
      $region25: #{tpu_custom_call.1} parent=23 // pred_check
        %p1179 = pneg %p63
      $region26: #{tpu_custom_call.1} parent=23 // pred_check_branch
        %1181 = sbr.rel (%p1179) target = $region28
      $region27: #{tpu_custom_call.1} parent=23 // pred_region
        %s1182 = smul.u32 2, %s19
      $region28: #{tpu_custom_call.1} parent=23 // pred_fallthru
        _
    $region24: #{tpu_custom_call.1} parent=5 // pred_fallthru
      _
    %p1183 = scmp.le.s32.totalorder 2, %s14
    // Predicated region
    $region29: #{tpu_custom_call.1} parent=5 // pred_check
      %p1184 = pneg %p1183
    $region30: #{tpu_custom_call.1} parent=5 // pred_check_branch
      %1186 = sbr.rel (%p1184) target = $region32
    $region31: #{tpu_custom_call.1} parent=5 // pred_region
      %s1187 = ssub.s32 %s14, 2
      // Predicated region
      $region33: #{tpu_custom_call.1} parent=31 // pred_check
        %p1188 = pneg %p69
      $region34: #{tpu_custom_call.1} parent=31 // pred_check_branch
        %1190 = sbr.rel (%p1188) target = $region36
      $region35: #{tpu_custom_call.1} parent=31 // pred_region
        %s1191 = smul.u32 2, %s20
        %p1192 = scmp.lt.s32.totalorder %s1191, 7
        %s1193 = scalar_select %p1192, %s1191, 7
        %s1194 = smul.addr %s1193, 8
        %s1195 = scalar_lea.vmem %s2, %s1194
      $region36: #{tpu_custom_call.1} parent=31 // pred_fallthru
        _
    $region32: #{tpu_custom_call.1} parent=5 // pred_fallthru
      _
  $region6: #{tpu_custom_call.1} parent=0 // loop_footer
    %s18 = sadd.s32 1, %s14
  $region7: #{tpu_custom_call.1} parent=0 // loop_footer_branch
    %13 = sbr.rel target = $region3
  $region8: #{tpu_custom_call.1} parent=0 // loop_exit
    _

</llo_original>
